<compile_context>
chip_gen: v7x
topology: tpu7x:2x2x1
jax: 0.10.0
libtpu: 0.0.40
codegen_flags: <defaults>
</compile_context>

<pallas_src>
import jax
import jax.numpy as jnp
from jax.experimental import pallas as pl
from jax.experimental.pallas import tpu as pltpu


def rprelu1d_kernel(x_ref, params_ref, o_ref):
    x = x_ref[...]                     # (TN, C, L), activation dtype
    p = params_ref[...]                # (3, C, 1), float32, VMEM-resident
    g = p[0][None, :, :]               # (1, C, 1) -> broadcast over batch & lanes
    b1 = p[1][None, :, :]
    b2 = p[2][None, :, :]

    xb = x.astype(jnp.float32) + b1
    out = jnp.where(xb > 0, xb, xb * g) + b2
    o_ref[...] = out.astype(o_ref.dtype)


def rprelu1d(x, gamma, beta1, beta2):
    """x: (N, C, L); gamma/beta1/beta2: (1, C, 1) (PyTorch param shapes)."""
    N, C, L = x.shape

    # Fuse the three per-channel params into a single (3, C, 1) f32 array.
    params = jnp.stack(
        [gamma.reshape(C, 1), beta1.reshape(C, 1), beta2.reshape(C, 1)], axis=0
    ).astype(jnp.float32)

    # Pick TN so each activation block is ~2 MiB (double-buffered in + out
    # then needs ~8 MiB of VMEM: safe on v5e/v6e/v7x default scoped limits),
    # while keeping >=2 grid steps when N allows so v7x's 2 TCs both get work.
    itemsize = jnp.dtype(x.dtype).itemsize
    row_bytes = C * L * itemsize
    target_block_bytes = 2 * 1024 * 1024
    tn = max(1, min(N, target_block_bytes // max(1, row_bytes)))
    if N >= 2 and pl.cdiv(N, tn) < 2:
        tn = pl.cdiv(N, 2)
    grid_n = pl.cdiv(N, tn)

    cost = pl.CostEstimate(
        flops=4 * N * C * L,
        transcendentals=0,
        bytes_accessed=2 * N * C * L * itemsize + 3 * C * 4,
    )

    return pl.pallas_call(
        rprelu1d_kernel,
        out_shape=jax.ShapeDtypeStruct((N, C, L), x.dtype),
        grid_spec=pltpu.PrefetchScalarGridSpec(
            num_scalar_prefetch=0,
            grid=(grid_n,),
            in_specs=[
                pl.BlockSpec((tn, C, L), lambda i: (i, 0, 0)),
                pl.BlockSpec((3, C, 1), lambda i: (0, 0, 0)),
            ],
            out_specs=pl.BlockSpec((tn, C, L), lambda i: (i, 0, 0)),
        ),
        compiler_params=pltpu.CompilerParams(
            dimension_semantics=("parallel",)),
        cost_estimate=cost,
    )(x, params)


if __name__ == "__main__":
    N, C, L = 2, 8, 128
    key = jax.random.PRNGKey(0)
    x = jax.random.normal(key, (N, C, L), dtype=jnp.float32)

    # Deterministic parameter init matching nn.Module.__init__:
    init = 0.25
    gamma = jnp.ones((1, C, 1), dtype=jnp.float32) * init
    beta1 = jnp.zeros((1, C, 1), dtype=jnp.float32)
    beta2 = jnp.zeros((1, C, 1), dtype=jnp.float32)

    out = rprelu1d(x, gamma, beta1, beta2)
    out = jax.block_until_ready(out)

    # Plain-JAX reference check of the forward semantics.
    xb = x + beta1
    ref = jnp.where(xb > 0, xb + beta2, xb * gamma + beta2)
    assert out.shape == ref.shape and out.dtype == ref.dtype
    assert jnp.allclose(out, ref, atol=1e-6, rtol=1e-6)

    print("KERNEL_OK")
</pallas_src>

<mosaic_0001>
module attributes {stable_mosaic.version = 11 : i64} {
  func.func @rprelu1d_kernel(%arg0: i32, %arg1: memref<1x8x128xf32, #tpu.memory_space<vmem>>, %arg2: memref<3x8x1xf32, #tpu.memory_space<vmem>>, %arg3: memref<1x8x128xf32, #tpu.memory_space<vmem>>) attributes {dimension_semantics = [#tpu.dimension_semantics<parallel>], iteration_bounds = array<i64: 2>, scalar_prefetch = 0 : i64, scratch_operands = 0 : i64, tpu.core_type = #tpu.core_type<tc>, window_params = [{transform_indices = @transform_0, window_bounds = array<i64: 1, 8, 128>}, {pipeline_mode = #tpu.pipeline_mode<synchronous>, transform_indices = @transform_1, window_bounds = array<i64: 3, 8, 1>}, {transform_indices = @transform_2, window_bounds = array<i64: 1, 8, 128>}]} {
    %c0 = arith.constant 0 : index
    %c0_0 = arith.constant 0 : index
    %c0_1 = arith.constant 0 : index
    %0 = vector.load %arg1[%c0, %c0_0, %c0_1] : memref<1x8x128xf32, #tpu.memory_space<vmem>>, vector<1x8x128xf32>
    %c0_2 = arith.constant 0 : index
    %c0_3 = arith.constant 0 : index
    %c0_4 = arith.constant 0 : index
    %1 = vector.load %arg2[%c0_2, %c0_3, %c0_4] : memref<3x8x1xf32, #tpu.memory_space<vmem>>, vector<3x8x1xf32>
    %2 = vector.extract_strided_slice %1 {offsets = [0, 0, 0], sizes = [1, 8, 1], strides = [1, 1, 1]} : vector<3x8x1xf32> to vector<1x8x1xf32>
    %3 = vector.shape_cast %2 : vector<1x8x1xf32> to vector<8x1xf32>
    %4 = vector.shape_cast %3 : vector<8x1xf32> to vector<1x8x1xf32>
    %5 = vector.extract_strided_slice %1 {offsets = [1, 0, 0], sizes = [1, 8, 1], strides = [1, 1, 1]} : vector<3x8x1xf32> to vector<1x8x1xf32>
    %6 = vector.shape_cast %5 : vector<1x8x1xf32> to vector<8x1xf32>
    %7 = vector.shape_cast %6 : vector<8x1xf32> to vector<1x8x1xf32>
    %8 = vector.extract_strided_slice %1 {offsets = [2, 0, 0], sizes = [1, 8, 1], strides = [1, 1, 1]} : vector<3x8x1xf32> to vector<1x8x1xf32>
    %9 = vector.shape_cast %8 : vector<1x8x1xf32> to vector<8x1xf32>
    %10 = vector.shape_cast %9 : vector<8x1xf32> to vector<1x8x1xf32>
    %11 = vector.broadcast %7 : vector<1x8x1xf32> to vector<1x8x128xf32>
    %12 = arith.addf %0, %11 : vector<1x8x128xf32>
    %cst = arith.constant 0.000000e+00 : f32
    %13 = vector.broadcast %cst : f32 to vector<1x8x128xf32>
    %14 = arith.cmpf ogt, %12, %13 : vector<1x8x128xf32>
    %15 = vector.broadcast %4 : vector<1x8x1xf32> to vector<1x8x128xf32>
    %16 = arith.mulf %12, %15 : vector<1x8x128xf32>
    %17 = arith.select %14, %12, %16 : vector<1x8x128xi1>, vector<1x8x128xf32>
    %18 = vector.broadcast %10 : vector<1x8x1xf32> to vector<1x8x128xf32>
    %19 = arith.addf %17, %18 : vector<1x8x128xf32>
    %c0_5 = arith.constant 0 : index
    %c0_6 = arith.constant 0 : index
    %c0_7 = arith.constant 0 : index
    %20 = vector.load %arg3[%c0_5, %c0_6, %c0_7] : memref<1x8x128xf32, #tpu.memory_space<vmem>>, vector<1x8x128xf32>
    tpu.vector_store %arg3[%c0_5, %c0_6, %c0_7], %19 {strides = array<i32>} : memref<1x8x128xf32, #tpu.memory_space<vmem>>, vector<1x8x128xf32>,
    return
  }
  func.func @transform_0(%arg0: i32) -> (i32, i32, i32) {
    %c0_i32 = arith.constant 0 : i32
    %c0_i32_0 = arith.constant 0 : i32
    %c0_i32_1 = arith.constant 0 : i32
    return %arg0, %c0_i32, %c0_i32_0 : i32, i32, i32
  }
  func.func @transform_1(%arg0: i32) -> (i32, i32, i32) {
    %c0_i32 = arith.constant 0 : i32
    %c0_i32_0 = arith.constant 0 : i32
    %c0_i32_1 = arith.constant 0 : i32
    %c0_i32_2 = arith.constant 0 : i32
    return %c0_i32, %c0_i32_0, %c0_i32_1 : i32, i32, i32
  }
  func.func @transform_2(%arg0: i32) -> (i32, i32, i32) {
    %c0_i32 = arith.constant 0 : i32
    %c0_i32_0 = arith.constant 0 : i32
    %c0_i32_1 = arith.constant 0 : i32
    return %arg0, %c0_i32, %c0_i32_0 : i32, i32, i32
  }
}

</mosaic_0001>

<llo_original>
// kernel: tpu_custom_call.1
$region0: #{tpu_custom_call.1}
  #allocation0 [shape = 'u32[]', space=smem, size = 0x4, offset = 0x4, fixed_abs, tag = 'smem constant byte address 0x4 - core index']
  #allocation1 [shape = 'u32[144,128]{1,0:T(1,128)}', space=vmem, size = 0x12000, scoped, tag = 'internal scratch']
  %s0 = inlined_call_operand.vmem [shape: f32[2,8,128], index: 0, kind: input, shape index: {}]
  %s1 = inlined_call_operand.vmem [shape: f32[3,8,1], index: 1, kind: input, shape index: {}]
  %s2 = inlined_call_operand.hbm [shape: f32[2,8,128], index: 2, kind: output, shape index: {}]
  %s3 = sld [smem:[#allocation0]]
  $region41: #{tpu_custom_call.1} parent=0
    _
  %s5 = ssub.s32 1, %s3
  %s6 = scalar_select 0, %s5, %s3
  $region1: #{tpu_custom_call.1} parent=0
    #allocation2 [shape = 'u8[8192]{0}', space=vmem, size = 0x2000, scoped, tag = 'output window, operand 0']
    #allocation3 [shape = 's32[2]{0}', space=sflag, size = 0x8, scoped, tag = 'scoped memory for tpu_custom_call.1']
    %7 = vsyncpa [#allocation3], 0
    %s8 = scalar_lea.sflag [#allocation3], 1
    %9 = vsyncpa %s8, 0
    loop: start=0, step=1, limit=4
    $region2: #{tpu_custom_call.1} parent=1 // loop_pre_header
      _
    $region3: #{tpu_custom_call.1} parent=1 // loop_header
      %s11 = sphi 0, %s15
      %p12 = scmp.ge.s32.totalorder %s11, 4
      %s21 = sphi 0, %s23
      %s24 = sphi 0, %s21
      %s25 = sphi 0, %s24
      %s41 = sphi 0, %s25
      %s45 = sphi 0, %s45
      %s47 = sphi 0, %s45
      %s48 = sphi 0, %s47
      %s62 = sphi 0, %s48
      %s68 = sphi 0, %s70
      %s71 = sphi 0, %s68
      %s72 = sphi 0, %s71
      %s88 = sphi 0, %s72
    $region4: #{tpu_custom_call.1} parent=1 // loop_header_branch
      %14 = sbr.rel (%p12) target = $region8
    $region5: #{tpu_custom_call.1} parent=1 // loop_body
      %s16 = ssub.s32 %s11, 1
      %s17 = ssub.s32 %s11, 2
      %s18 = sadd.s32 %s11, 1
      %s19 = ssub.s32 %s11, %s18
      %p20 = scmp.eq.s32.totalorder %s19, 0
      %s22 = sadd.s32 %s21, 1
      %s23 = scalar_select %p20, %s21, %s22
      %p26 = pneg %p20
      %p27 = scmp.eq.s32.totalorder %s11, 1
      %p28 = por %p26, %p27
      %p29 = scmp.ne.s32.totalorder %s21, %s24
      %p30 = scmp.eq.s32.totalorder %s11, 0
      %p31 = por %p29, %p30
      %p32 = scmp.ne.s32.totalorder %s21, %s24
      %p33 = scmp.eq.s32.totalorder %s16, 1
      %p34 = por %p32, %p33
      %p35 = scmp.ne.s32.totalorder %s24, %s25
      %p36 = scmp.eq.s32.totalorder %s16, 0
      %p37 = por %p35, %p36
      %p38 = scmp.ne.s32.totalorder %s24, %s25
      %p39 = scmp.eq.s32.totalorder %s17, 1
      %p40 = por %p38, %p39
      %p42 = scmp.ne.s32.totalorder %s25, %s41
      %p43 = scmp.eq.s32.totalorder %s17, 0
      %p44 = por %p42, %p43
      %s46 = sadd.s32 %s45, 1
      %p49 = scmp.eq.s32.totalorder %s11, 1
      %p50 = scmp.ne.s32.totalorder %s45, %s47
      %p51 = scmp.eq.s32.totalorder %s11, 0
      %p52 = por %p50, %p51
      %p53 = scmp.ne.s32.totalorder %s45, %s47
      %p54 = scmp.eq.s32.totalorder %s16, 1
      %p55 = por %p53, %p54
      %p56 = scmp.ne.s32.totalorder %s47, %s48
      %p57 = scmp.eq.s32.totalorder %s16, 0
      %p58 = por %p56, %p57
      %p59 = scmp.ne.s32.totalorder %s47, %s48
      %p60 = scmp.eq.s32.totalorder %s17, 1
      %p61 = por %p59, %p60
      %p63 = scmp.ne.s32.totalorder %s48, %s62
      %p64 = scmp.eq.s32.totalorder %s17, 0
      %p65 = por %p63, %p64
      %s66 = ssub.s32 %s11, %s18
      %p67 = scmp.eq.s32.totalorder %s66, 0
      %s69 = sadd.s32 %s68, 1
      %s70 = scalar_select %p67, %s68, %s69
      %p73 = pneg %p67
      %p74 = scmp.eq.s32.totalorder %s11, 1
      %p75 = por %p73, %p74
      %p76 = scmp.ne.s32.totalorder %s68, %s71
      %p77 = scmp.eq.s32.totalorder %s11, 0
      %p78 = por %p76, %p77
      %p79 = scmp.ne.s32.totalorder %s68, %s71
      %p80 = scmp.eq.s32.totalorder %s16, 1
      %p81 = por %p79, %p80
      %p82 = scmp.ne.s32.totalorder %s71, %s72
      %p83 = scmp.eq.s32.totalorder %s16, 0
      %p84 = por %p82, %p83
      %p85 = scmp.ne.s32.totalorder %s71, %s72
      %p86 = scmp.eq.s32.totalorder %s17, 1
      %p87 = por %p85, %p86
      %p89 = scmp.ne.s32.totalorder %s72, %s88
      %p90 = scmp.eq.s32.totalorder %s17, 0
      %p91 = por %p89, %p90
      %p92 = scmp.le.s32.totalorder 1, %s11
      %p93 = scmp.lt.s32.totalorder %s11, 3
      %p94 = pnand %p92, %p93
      %p95 = pneg %p94
      // Predicated region
      $region9: #{tpu_custom_call.1} parent=5 // pred_check
        _
      $region10: #{tpu_custom_call.1} parent=5 // pred_check_branch
        %97 = sbr.rel (%p94) target = $region12
      $region11: #{tpu_custom_call.1} parent=5 // pred_region
        %s98 = ssub.s32 %s11, 1
        // Predicated region
        $region13: #{tpu_custom_call.1} parent=11 // pred_check
          %p99 = pneg %p58
        $region14: #{tpu_custom_call.1} parent=11 // pred_check_branch
          %101 = sbr.rel (%p99) target = $region16
        $region15: #{tpu_custom_call.1} parent=11 // pred_region
          _
        $region16: #{tpu_custom_call.1} parent=11 // pred_fallthru
          _
      $region12: #{tpu_custom_call.1} parent=5 // pred_fallthru
        _
      %p102 = scmp.lt.s32.totalorder %s11, 2
      // Predicated region
      $region17: #{tpu_custom_call.1} parent=5 // pred_check
        %p103 = pneg %p102
      $region18: #{tpu_custom_call.1} parent=5 // pred_check_branch
        %105 = sbr.rel (%p103) target = $region20
      $region19: #{tpu_custom_call.1} parent=5 // pred_region
        // Predicated region
        $region21: #{tpu_custom_call.1} parent=19 // pred_check
          %p106 = pneg %p31
        $region22: #{tpu_custom_call.1} parent=19 // pred_check_branch
          %108 = sbr.rel (%p106) target = $region24
        $region23: #{tpu_custom_call.1} parent=19 // pred_region
          %p109 = scmp.lt.s32.totalorder %s11, 1
          %s110 = scalar_select %p109, %s11, 1
          %s111 = smul.addr %s110, 8
          %s112 = scalar_lea.vmem %s0, %s111
        $region24: #{tpu_custom_call.1} parent=19 // pred_fallthru
          _
      $region20: #{tpu_custom_call.1} parent=5 // pred_fallthru
        _
      %p113 = scmp.le.s32.totalorder 1, %s11
      %p114 = scmp.lt.s32.totalorder %s11, 3
      %p115 = pnand %p113, %p114
      %p116 = pneg %p115
      // Predicated region
      $region25: #{tpu_custom_call.1} parent=5 // pred_check
        _
      $region26: #{tpu_custom_call.1} parent=5 // pred_check_branch
        %118 = sbr.rel (%p115) target = $region28
      $region27: #{tpu_custom_call.1} parent=5 // pred_region
        %s119 = ssub.s32 %s11, 1
        %p120 = scmp.lt.s32.totalorder %s16, 1
        %s121 = scalar_select %p120, %s16, 1
        %s122 = smul.addr %s121, 8
        %s123 = scalar_lea.vmem %s0, %s122
        %p124 = pneg %p37
        %p125 = pneg %p34
        %p126 = pneg %p58
        %p127 = pneg %p55
        %p128 = pneg %p84
        %p129 = pneg %p81
        %s130 = sand.u32 %s71, 1
        %s131 = scalar_lea.sflag [#allocation3], %s130
        %s132 = sand.u32 %s71, 1
        %s133 = smul.addr %s132, 8
        %s134 = scalar_lea.vmem [#allocation2], %s133
        %p135 = scmp.lt.s32.totalorder %s16, 1
        %s136 = scalar_select %p135, %s16, 1
        %s137 = smul.addr %s136, 8
        %s138 = scalar_lea.vmem %s0, %s137
        %v139 = vld [vmem:[%s138] sm:$0xff]
        %v140 = vld [vmem:[%s1] sm:$0xff]
        %v141 = vld [vmem:[%s1 + $0x8] sm:$0xff]
        %v142 = vld [vmem:[%s1 + $0x10] sm:$0xff]
        %144 = vset.pattern.permute.xlu0 0
        %145 = vperm.xlu0 %144, %v141
        %v146 = vpop.permute.xlu0 %145
        %v148 = vadd.f32 %v139, %v146
        %vm149 = vcmp.gt.f32.partialorder %v148, 0.0
        %151 = vset.pattern.permute.xlu0 0
        %152 = vperm.xlu0 %151, %v140
        %v153 = vpop.permute.xlu0 %152
        %v155 = vmul.f32 %v148, %v153
        %v156 = vsel %vm149, %v148, %v155
        %158 = vset.pattern.permute.xlu0 0
        %159 = vperm.xlu0 %158, %v142
        %v160 = vpop.permute.xlu0 %159
        %v162 = vadd.f32 %v156, %v160
        %163 = vst [vmem:[%s134] sm:$0xff] %v162
        %s164 = sand.u32 %s71, 1
        %s165 = scalar_lea.sflag [#allocation3], %s164
        %s166 = sand.u32 %s71, 1
        %s167 = smul.addr %s166, 8
        %s168 = scalar_lea.vmem [#allocation2], %s167
        // Predicated region
        $region29: #{tpu_custom_call.1} parent=27 // pred_check
          %p169 = pneg %p81
        $region30: #{tpu_custom_call.1} parent=27 // pred_check_branch
          %171 = sbr.rel (%p169) target = $region32
        $region31: #{tpu_custom_call.1} parent=27 // pred_region
          %s173 = ssub.s32 128, 128
          %174 = vsyncadd %s165, %s173
          %s175 = smul.addr %s16, 128
          %s176 = scalar_lea.hbm %s2, %s175
          %s178 = sshll.u32 %s168, 4
          %s179 = int_to_ptr.vmem [resolvable:$true] %s178
          %181 = dma.vmem_to_hbm [thread:$0]  %s179, 128, %s176, %s165
        $region32: #{tpu_custom_call.1} parent=27 // pred_fallthru
          _
      $region28: #{tpu_custom_call.1} parent=5 // pred_fallthru
        _
      %p182 = scmp.le.s32.totalorder 2, %s11
      // Predicated region
      $region33: #{tpu_custom_call.1} parent=5 // pred_check
        %p183 = pneg %p182
      $region34: #{tpu_custom_call.1} parent=5 // pred_check_branch
        %185 = sbr.rel (%p183) target = $region36
      $region35: #{tpu_custom_call.1} parent=5 // pred_region
        %s186 = ssub.s32 %s11, 2
        // Predicated region
        $region37: #{tpu_custom_call.1} parent=35 // pred_check
          %p187 = pneg %p87
        $region38: #{tpu_custom_call.1} parent=35 // pred_check_branch
          %189 = sbr.rel (%p187) target = $region40
        $region39: #{tpu_custom_call.1} parent=35 // pred_region
          %s190 = sand.u32 %s72, 1
          %s191 = scalar_lea.sflag [#allocation3], %s190
          %s192 = sand.u32 %s72, 1
          %s193 = smul.addr %s192, 8
          %s194 = scalar_lea.vmem [#allocation2], %s193
          %195 = dma.done %s191, 128
        $region40: #{tpu_custom_call.1} parent=35 // pred_fallthru
          _
      $region36: #{tpu_custom_call.1} parent=5 // pred_fallthru
        _
    $region6: #{tpu_custom_call.1} parent=1 // loop_footer
      %s15 = sadd.s32 1, %s11
    $region7: #{tpu_custom_call.1} parent=1 // loop_footer_branch
      %10 = sbr.rel target = $region3
    $region8: #{tpu_custom_call.1} parent=1 // loop_exit
      _
    %196 = vsyncpa [#allocation3], 1
    %s197 = scalar_lea.sflag [#allocation3], 1
    %198 = vsyncpa %s197, 1

</llo_original>
